<compile_context>
chip_gen: v6e
topology: v6e:2x2x1
jax: 0.10.0
libtpu: 0.0.40
codegen_flags: <defaults>
</compile_context>

<pallas_src>
import functools

import jax
import jax.numpy as jnp
from jax.experimental import pallas as pl
from jax.experimental.pallas import tpu as pltpu


# ----------------------------- small static helpers -----------------------------
def _round_up(x, m):
    return (x + m - 1) // m * m


def _pick_tm(n_p):
    """Largest row tile <= 512 dividing n_p while keeping >= 2 row tiles (v7x)."""
    for t in (512, 256, 128):
        if n_p % t == 0 and n_p // t >= 2:
            return t
    return 128


def _pick_tn(n_out_p):
    """Whole feature dim if it fits one lane-dense tile, else largest divisor."""
    if n_out_p <= 512:
        return n_out_p
    for t in (512, 256, 128):
        if n_out_p % t == 0:
            return t
    return 128


def _pick_tk(extent_p, whole_cap):
    """Reduction tile: whole extent when small, else largest 128-multiple divisor."""
    if extent_p <= whole_cap:
        return extent_p
    for t in (512, 256, 128):
        if extent_p % t == 0:
            return t
    return 128


def _pad_cast(a, rows, cols, dtype):
    """Cast first (half-width pad traffic for bf16), skip pad if already aligned."""
    if a.dtype != dtype:
        a = a.astype(dtype)
    r, c = a.shape
    if r != rows or c != cols:
        a = jnp.pad(a, ((0, rows - r), (0, cols - c)))
    return a


# ---------------- phase 1: support = x @ W ----------------
def _matmul_single_k_kernel(x_ref, w_ref, o_ref):
    o_ref[...] = jnp.dot(x_ref[...], w_ref[...],
                         preferred_element_type=jnp.float32).astype(o_ref.dtype)


def _matmul_acc_kernel(x_ref, w_ref, o_ref, acc_ref):
    k = pl.program_id(2)

    @pl.when(k == 0)
    def _():
        acc_ref[...] = jnp.zeros_like(acc_ref)

    acc_ref[...] += jnp.dot(x_ref[...], w_ref[...],
                            preferred_element_type=jnp.float32)

    @pl.when(k == pl.num_programs(2) - 1)
    def _():
        o_ref[...] = acc_ref[...].astype(o_ref.dtype)


# -------- phase 2: out = relu(adj @ support + b) + residual --------
def _aggregate_single_k_kernel(adj_ref, s_ref, b_ref, res_ref, o_ref):
    gc = jnp.dot(adj_ref[...], s_ref[...], preferred_element_type=jnp.float32)
    gc = gc + b_ref[...].astype(jnp.float32)
    out = jnp.maximum(gc, 0.0) + res_ref[...].astype(jnp.float32)
    o_ref[...] = out.astype(o_ref.dtype)


def _aggregate_acc_kernel(adj_ref, s_ref, b_ref, res_ref, o_ref, acc_ref):
    k = pl.program_id(2)

    @pl.when(k == 0)
    def _():
        acc_ref[...] = jnp.zeros_like(acc_ref)

    acc_ref[...] += jnp.dot(adj_ref[...], s_ref[...],
                            preferred_element_type=jnp.float32)

    @pl.when(k == pl.num_programs(2) - 1)
    def _():
        gc = acc_ref[...] + b_ref[...].astype(jnp.float32)
        out = jnp.maximum(gc, 0.0) + res_ref[...].astype(jnp.float32)
        o_ref[...] = out.astype(o_ref.dtype)


_VMEM_LIMIT = 32 * 1024 * 1024  # tiles stay a few MiB; safe on v5e/v6e/v7x
_PARAMS_2D = pltpu.CompilerParams(
    dimension_semantics=("parallel", "parallel"), vmem_limit_bytes=_VMEM_LIMIT)
_PARAMS_3D = pltpu.CompilerParams(
    dimension_semantics=("parallel", "parallel", "arbitrary"),
    vmem_limit_bytes=_VMEM_LIMIT)


@functools.partial(jax.jit, static_argnames=("compute_dtype",))
def gcn_forward(x, adj, w, b, *, compute_dtype=jnp.bfloat16):
    """out = relu(adj @ (x @ w) + b) + x[:, :-1]  (padded/tiled Pallas impl)."""
    N, n_in = x.shape
    n_out = w.shape[1]
    assert n_out == n_in - 1, "residual x[:, :-1] requires n_out == n_in - 1"

    # Lane-aligned padded extents: plain 128 alignment only (no lcm blow-up).
    N_p = _round_up(N, 128)
    n_in_p = _round_up(n_in, 128)
    n_out_p = _round_up(n_out, 128)

    # Tile choices.
    tm = _pick_tm(N_p)                 # row tile (keeps >=2 parallel tiles if possible)
    tn = _pick_tn(n_out_p)             # feature tile = whole padded feature dim (<=512)
    tk_feat = _pick_tk(n_in_p, 512)    # phase-1 reduction tile
    tk_nodes = _pick_tk(N_p, 1024)     # phase-2 reduction tile (whole panel if small)

    # Matmul operands in compute_dtype (bf16 default); epilogue stays f32.
    xp = _pad_cast(x, N_p, n_in_p, compute_dtype)
    adjp = _pad_cast(adj, N_p, N_p, compute_dtype)
    wp = _pad_cast(w, n_in_p, n_out_p, compute_dtype)
    bp = _pad_cast(b.reshape(1, n_out), 1, n_out_p, jnp.float32)
    resp = _pad_cast(x[:, :n_out], N_p, n_out_p, jnp.float32)   # pre-sliced residual

    # ------------------- phase 1: support = x @ W -------------------
    # NOTE: support is kept in compute_dtype (bf16 by default) to halve the
    # phase-2 HBM read; pass compute_dtype=jnp.float32 if accuracy matters more.
    if n_in_p // tk_feat == 1:
        support = pl.pallas_call(
            _matmul_single_k_kernel,
            out_shape=jax.ShapeDtypeStruct((N_p, n_out_p), compute_dtype),
            grid_spec=pltpu.PrefetchScalarGridSpec(
                num_scalar_prefetch=0,
                grid=(N_p // tm, n_out_p // tn),
                in_specs=[
                    pl.BlockSpec((tm, n_in_p), lambda i, j: (i, 0)),
                    pl.BlockSpec((n_in_p, tn), lambda i, j: (0, j)),
                ],
                out_specs=pl.BlockSpec((tm, tn), lambda i, j: (i, j)),
            ),
            compiler_params=_PARAMS_2D,
        )(xp, wp)
    else:
        support = pl.pallas_call(
            _matmul_acc_kernel,
            out_shape=jax.ShapeDtypeStruct((N_p, n_out_p), compute_dtype),
            grid_spec=pltpu.PrefetchScalarGridSpec(
                num_scalar_prefetch=0,
                grid=(N_p // tm, n_out_p // tn, n_in_p // tk_feat),
                in_specs=[
                    pl.BlockSpec((tm, tk_feat), lambda i, j, k: (i, k)),
                    pl.BlockSpec((tk_feat, tn), lambda i, j, k: (k, j)),
                ],
                out_specs=pl.BlockSpec((tm, tn), lambda i, j, k: (i, j)),
                scratch_shapes=[pltpu.VMEM((tm, tn), jnp.float32)],
            ),
            compiler_params=_PARAMS_3D,
        )(xp, wp)

    # -------- phase 2: out = relu(adj @ support + b) + residual --------
    # With tn == n_out_p (common case) adj is read from HBM exactly once.
    if N_p // tk_nodes == 1:
        out_p = pl.pallas_call(
            _aggregate_single_k_kernel,
            out_shape=jax.ShapeDtypeStruct((N_p, n_out_p), jnp.float32),
            grid_spec=pltpu.PrefetchScalarGridSpec(
                num_scalar_prefetch=0,
                grid=(N_p // tm, n_out_p // tn),
                in_specs=[
                    pl.BlockSpec((tm, N_p), lambda i, j: (i, 0)),      # adj row panel
                    pl.BlockSpec((N_p, tn), lambda i, j: (0, j)),      # support panel
                    pl.BlockSpec((1, tn), lambda i, j: (0, j)),        # bias
                    pl.BlockSpec((tm, tn), lambda i, j: (i, j)),       # residual
                ],
                out_specs=pl.BlockSpec((tm, tn), lambda i, j: (i, j)),
            ),
            compiler_params=_PARAMS_2D,
        )(adjp, support, bp, resp)
    else:
        out_p = pl.pallas_call(
            _aggregate_acc_kernel,
            out_shape=jax.ShapeDtypeStruct((N_p, n_out_p), jnp.float32),
            grid_spec=pltpu.PrefetchScalarGridSpec(
                num_scalar_prefetch=0,
                grid=(N_p // tm, n_out_p // tn, N_p // tk_nodes),
                in_specs=[
                    pl.BlockSpec((tm, tk_nodes), lambda i, j, k: (i, k)),
                    pl.BlockSpec((tk_nodes, tn), lambda i, j, k: (k, j)),
                    pl.BlockSpec((1, tn), lambda i, j, k: (0, j)),
                    pl.BlockSpec((tm, tn), lambda i, j, k: (i, j)),
                ],
                out_specs=pl.BlockSpec((tm, tn), lambda i, j, k: (i, j)),
                scratch_shapes=[pltpu.VMEM((tm, tn), jnp.float32)],
            ),
            compiler_params=_PARAMS_3D,
        )(adjp, support, bp, resp)

    return out_p[:N, :n_out]


def gcn_reference(x, adj, w, b):
    support = x @ w
    gc = adj @ support + b[None, :]
    return jnp.maximum(gc, 0.0) + x[:, :-1]


def _make_inputs(key, N, n_in, n_out):
    kx, ka, kw, kb = jax.random.split(key, 4)
    x = jax.random.normal(kx, (N, n_in), dtype=jnp.float32)
    # Deterministic symmetric normalized adjacency (synthetic dense graph).
    a = jax.random.uniform(ka, (N, N), dtype=jnp.float32)
    a = (a + a.T) * 0.5 + jnp.eye(N, dtype=jnp.float32)
    d = 1.0 / jnp.sqrt(a.sum(axis=1))
    adj = d[:, None] * a * d[None, :]
    w = jax.random.uniform(kw, (n_in, n_out), dtype=jnp.float32,
                           minval=-0.1, maxval=0.1)
    b = jax.random.uniform(kb, (n_out,), dtype=jnp.float32,
                           minval=-0.1, maxval=0.1)
    return x, adj, w, b


if __name__ == "__main__":
    # Small case matching the module's toy sizes (f32 path, tight tolerance).
    n_out = 32
    n_in = n_out + 1
    x, adj, w, b = _make_inputs(jax.random.PRNGKey(0), 16, n_in, n_out)
    out = jax.block_until_ready(gcn_forward(x, adj, w, b, compute_dtype=jnp.float32))
    ref = gcn_reference(x, adj, w, b)
    assert out.shape == (16, n_out)
    assert jnp.allclose(out, ref, atol=1e-5, rtol=1e-5), "small f32 mismatch"

    # Larger case exercising the multi-row-tile grid (f32 path, no lcm padding blow-up).
    N2, n_out2 = 384, 256
    x2, adj2, w2, b2 = _make_inputs(jax.random.PRNGKey(1), N2, n_out2 + 1, n_out2)
    out2 = jax.block_until_ready(
        gcn_forward(x2, adj2, w2, b2, compute_dtype=jnp.float32))
    ref2 = gcn_reference(x2, adj2, w2, b2)
    assert out2.shape == (N2, n_out2)
    assert jnp.allclose(out2, ref2, atol=1e-4, rtol=1e-4), "tiled f32 mismatch"

    # Default path: bf16 matmul operands (MXU fast path + half HBM traffic),
    # f32 accumulate / bias / ReLU / residual.
    out3 = jax.block_until_ready(gcn_forward(x2, adj2, w2, b2))
    assert jnp.allclose(out3, ref2, atol=5e-2, rtol=5e-2), "bf16 mismatch"

    print("KERNEL_OK")
</pallas_src>

<mosaic_0001>
module attributes {stable_mosaic.version = 11 : i64} {
  func.func @_matmul_single_k_kernel(%arg0: i32, %arg1: i32, %arg2: memref<128x128xf32, #tpu.memory_space<vmem>>, %arg3: memref<128x128xf32, #tpu.memory_space<vmem>>, %arg4: memref<128x128xf32, #tpu.memory_space<vmem>>) attributes {dimension_semantics = [#tpu.dimension_semantics<parallel>, #tpu.dimension_semantics<parallel>], iteration_bounds = array<i64: 1, 1>, scalar_prefetch = 0 : i64, scratch_operands = 0 : i64, tpu.core_type = #tpu.core_type<tc>, window_params = [{transform_indices = @transform_0, window_bounds = array<i64: 128, 128>}, {transform_indices = @transform_1, window_bounds = array<i64: 128, 128>}, {transform_indices = @transform_2, window_bounds = array<i64: 128, 128>}]} {
    %c0 = arith.constant 0 : index
    %c0_0 = arith.constant 0 : index
    %0 = vector.load %arg2[%c0, %c0_0] : memref<128x128xf32, #tpu.memory_space<vmem>>, vector<128x128xf32>
    %c0_1 = arith.constant 0 : index
    %c0_2 = arith.constant 0 : index
    %1 = vector.load %arg3[%c0_1, %c0_2] : memref<128x128xf32, #tpu.memory_space<vmem>>, vector<128x128xf32>
    %cst = arith.constant dense<0.000000e+00> : vector<128x128xf32>
    %2 = tpu.matmul %0, %1, %cst {dimension_numbers = #tpu.dot_dimension_numbers<[1], [0], [0], [1], [0, 0, 1, 1], [], []>} : vector<128x128xf32>, vector<128x128xf32>, vector<128x128xf32> -> vector<128x128xf32>
    %c0_3 = arith.constant 0 : index
    %c0_4 = arith.constant 0 : index
    %3 = vector.load %arg4[%c0_3, %c0_4] : memref<128x128xf32, #tpu.memory_space<vmem>>, vector<128x128xf32>
    tpu.vector_store %arg4[%c0_3, %c0_4], %2 {strides = array<i32>} : memref<128x128xf32, #tpu.memory_space<vmem>>, vector<128x128xf32>,
    return
  }
  func.func @transform_0(%arg0: i32, %arg1: i32) -> (i32, i32) {
    %c0_i32 = arith.constant 0 : i32
    %c0_i32_0 = arith.constant 0 : i32
    return %arg0, %c0_i32 : i32, i32
  }
  func.func @transform_1(%arg0: i32, %arg1: i32) -> (i32, i32) {
    %c0_i32 = arith.constant 0 : i32
    %c0_i32_0 = arith.constant 0 : i32
    return %c0_i32, %arg1 : i32, i32
  }
  func.func @transform_2(%arg0: i32, %arg1: i32) -> (i32, i32) {
    %c0_i32 = arith.constant 0 : i32
    return %arg0, %arg1 : i32, i32
  }
}

module attributes {stable_mosaic.version = 11 : i64} {
  func.func @_aggregate_single_k_kernel(%arg0: i32, %arg1: i32, %arg2: memref<128x128xf32, #tpu.memory_space<vmem>>, %arg3: memref<128x128xf32, #tpu.memory_space<vmem>>, %arg4: memref<1x128xf32, #tpu.memory_space<vmem>>, %arg5: memref<128x128xf32, #tpu.memory_space<vmem>>, %arg6: memref<128x128xf32, #tpu.memory_space<vmem>>) attributes {dimension_semantics = [#tpu.dimension_semantics<parallel>, #tpu.dimension_semantics<parallel>], iteration_bounds = array<i64: 1, 1>, scalar_prefetch = 0 : i64, scratch_operands = 0 : i64, tpu.core_type = #tpu.core_type<tc>, window_params = [{transform_indices = @transform_0, window_bounds = array<i64: 128, 128>}, {transform_indices = @transform_1, window_bounds = array<i64: 128, 128>}, {transform_indices = @transform_2, window_bounds = array<i64: 1, 128>}, {transform_indices = @transform_3, window_bounds = array<i64: 128, 128>}, {transform_indices = @transform_4, window_bounds = array<i64: 128, 128>}]} {
    %c0 = arith.constant 0 : index
    %c0_0 = arith.constant 0 : index
    %0 = vector.load %arg2[%c0, %c0_0] : memref<128x128xf32, #tpu.memory_space<vmem>>, vector<128x128xf32>
    %c0_1 = arith.constant 0 : index
    %c0_2 = arith.constant 0 : index
    %1 = vector.load %arg3[%c0_1, %c0_2] : memref<128x128xf32, #tpu.memory_space<vmem>>, vector<128x128xf32>
    %cst = arith.constant dense<0.000000e+00> : vector<128x128xf32>
    %2 = tpu.matmul %0, %1, %cst {dimension_numbers = #tpu.dot_dimension_numbers<[1], [0], [0], [1], [0, 0, 1, 1], [], []>} : vector<128x128xf32>, vector<128x128xf32>, vector<128x128xf32> -> vector<128x128xf32>
    %c0_3 = arith.constant 0 : index
    %c0_4 = arith.constant 0 : index
    %3 = vector.load %arg4[%c0_3, %c0_4] : memref<1x128xf32, #tpu.memory_space<vmem>>, vector<1x128xf32>
    %4 = vector.broadcast %3 : vector<1x128xf32> to vector<128x128xf32>
    %5 = arith.addf %2, %4 : vector<128x128xf32>
    %cst_5 = arith.constant 0.000000e+00 : f32
    %6 = vector.broadcast %cst_5 : f32 to vector<128x128xf32>
    %7 = arith.maximumf %5, %6 : vector<128x128xf32>
    %c0_6 = arith.constant 0 : index
    %c0_7 = arith.constant 0 : index
    %8 = vector.load %arg5[%c0_6, %c0_7] : memref<128x128xf32, #tpu.memory_space<vmem>>, vector<128x128xf32>
    %9 = arith.addf %7, %8 : vector<128x128xf32>
    %c0_8 = arith.constant 0 : index
    %c0_9 = arith.constant 0 : index
    %10 = vector.load %arg6[%c0_8, %c0_9] : memref<128x128xf32, #tpu.memory_space<vmem>>, vector<128x128xf32>
    tpu.vector_store %arg6[%c0_8, %c0_9], %9 {strides = array<i32>} : memref<128x128xf32, #tpu.memory_space<vmem>>, vector<128x128xf32>,
    return
  }
  func.func @transform_0(%arg0: i32, %arg1: i32) -> (i32, i32) {
    %c0_i32 = arith.constant 0 : i32
    %c0_i32_0 = arith.constant 0 : i32
    return %arg0, %c0_i32 : i32, i32
  }
  func.func @transform_1(%arg0: i32, %arg1: i32) -> (i32, i32) {
    %c0_i32 = arith.constant 0 : i32
    %c0_i32_0 = arith.constant 0 : i32
    return %c0_i32, %arg1 : i32, i32
  }
  func.func @transform_2(%arg0: i32, %arg1: i32) -> (i32, i32) {
    %c0_i32 = arith.constant 0 : i32
    %c0_i32_0 = arith.constant 0 : i32
    return %c0_i32, %arg1 : i32, i32
  }
  func.func @transform_3(%arg0: i32, %arg1: i32) -> (i32, i32) {
    %c0_i32 = arith.constant 0 : i32
    return %arg0, %arg1 : i32, i32
  }
  func.func @transform_4(%arg0: i32, %arg1: i32) -> (i32, i32) {
    %c0_i32 = arith.constant 0 : i32
    return %arg0, %arg1 : i32, i32
  }
}

</mosaic_0001>

<llo_original>
// kernel: gcn_forward.2
$region0: #{gcn_forward.2}
  #allocation0 [shape = 'u32[]', space=smem, size = 0x4, offset = 0x4, fixed_abs, tag = 'smem constant byte address 0x4 - core index']
  #allocation1 [shape = 'u32[144,128]{1,0:T(1,128)}', space=vmem, size = 0x12000, scoped, tag = 'internal scratch']
  %s0 = inlined_call_operand.vmem [shape: f32[128,128], index: 0, kind: input, shape index: {}]
  %s1 = inlined_call_operand.vmem [shape: f32[128,128], index: 1, kind: input, shape index: {}]
  %s2 = inlined_call_operand.vmem [shape: f32[128,128], index: 2, kind: output, shape index: {}]
  %s3 = sld [smem:[#allocation0]]
  $region18: #{gcn_forward.2} parent=0
    _
  %s5 = ssub.s32 1, %s3
  %s6 = scalar_select 0, %s5, %s3
  // Predicated region
  $region2: #{gcn_forward.2} parent=0 // pred_check
    _
  $region3: #{gcn_forward.2} parent=0 // pred_check_branch
    %8 = sbr.rel (0) target = $region5
  $region4: #{gcn_forward.2} parent=0 // pred_region
    _
  $region5: #{gcn_forward.2} parent=0 // pred_fallthru
    _
  // Predicated region
  $region6: #{gcn_forward.2} parent=0 // pred_check
    _
  $region7: #{gcn_forward.2} parent=0 // pred_check_branch
    %10 = sbr.rel (0) target = $region9
  $region8: #{gcn_forward.2} parent=0 // pred_region
    _
  $region9: #{gcn_forward.2} parent=0 // pred_fallthru
    _
  %v11 = vld [vmem:[%s0] sm:$0xff]
  %v12 = vld [vmem:[%s0 + $0x8] sm:$0xff]
  %v13 = vld [vmem:[%s0 + $0x10] sm:$0xff]
  %v14 = vld [vmem:[%s0 + $0x18] sm:$0xff]
  %v15 = vld [vmem:[%s0 + $0x20] sm:$0xff]
  %v16 = vld [vmem:[%s0 + $0x28] sm:$0xff]
  %v17 = vld [vmem:[%s0 + $0x30] sm:$0xff]
  %v18 = vld [vmem:[%s0 + $0x38] sm:$0xff]
  %v19 = vld [vmem:[%s0 + $0x40] sm:$0xff]
  %v20 = vld [vmem:[%s0 + $0x48] sm:$0xff]
  %v21 = vld [vmem:[%s0 + $0x50] sm:$0xff]
  %v22 = vld [vmem:[%s0 + $0x58] sm:$0xff]
  %v23 = vld [vmem:[%s0 + $0x60] sm:$0xff]
  %v24 = vld [vmem:[%s0 + $0x68] sm:$0xff]
  %v25 = vld [vmem:[%s0 + $0x70] sm:$0xff]
  %v26 = vld [vmem:[%s0 + $0x78] sm:$0xff]
  %v27 = vld [vmem:[%s1] sm:$0xff]
  %v28 = vld [vmem:[%s1 + $0x8] sm:$0xff]
  %v29 = vld [vmem:[%s1 + $0x10] sm:$0xff]
  %v30 = vld [vmem:[%s1 + $0x18] sm:$0xff]
  %v31 = vld [vmem:[%s1 + $0x20] sm:$0xff]
  %v32 = vld [vmem:[%s1 + $0x28] sm:$0xff]
  %v33 = vld [vmem:[%s1 + $0x30] sm:$0xff]
  %v34 = vld [vmem:[%s1 + $0x38] sm:$0xff]
  %v35 = vld [vmem:[%s1 + $0x40] sm:$0xff]
  %v36 = vld [vmem:[%s1 + $0x48] sm:$0xff]
  %v37 = vld [vmem:[%s1 + $0x50] sm:$0xff]
  %v38 = vld [vmem:[%s1 + $0x58] sm:$0xff]
  %v39 = vld [vmem:[%s1 + $0x60] sm:$0xff]
  %v40 = vld [vmem:[%s1 + $0x68] sm:$0xff]
  %v41 = vld [vmem:[%s1 + $0x70] sm:$0xff]
  %v42 = vld [vmem:[%s1 + $0x78] sm:$0xff]
  %43 = vmatprep.subr.mxu0 0.0
  %44 = vmatpush1.msra.mxu0 %v42
  %45 = vmatprep.subr.mxu0 0.0
  %46 = vmatpush1.msra.mxu0 %v41
  %47 = vmatprep.subr.mxu0 0.0
  %48 = vmatpush1.msra.mxu0 %v40
  %49 = vmatprep.subr.mxu0 0.0
  %50 = vmatpush1.msra.mxu0 %v39
  %51 = vmatprep.subr.mxu0 0.0
  %52 = vmatpush1.msra.mxu0 %v38
  %53 = vmatprep.subr.mxu0 0.0
  %54 = vmatpush1.msra.mxu0 %v37
  %55 = vmatprep.subr.mxu0 0.0
  %56 = vmatpush1.msra.mxu0 %v36
  %57 = vmatprep.subr.mxu0 0.0
  %58 = vmatpush1.msra.mxu0 %v35
  %59 = vmatprep.subr.mxu0 0.0
  %60 = vmatpush1.msra.mxu0 %v34
  %61 = vmatprep.subr.mxu0 0.0
  %62 = vmatpush1.msra.mxu0 %v33
  %63 = vmatprep.subr.mxu0 0.0
  %64 = vmatpush1.msra.mxu0 %v32
  %65 = vmatprep.subr.mxu0 0.0
  %66 = vmatpush1.msra.mxu0 %v31
  %67 = vmatprep.subr.mxu0 0.0
  %68 = vmatpush1.msra.mxu0 %v30
  %69 = vmatprep.subr.mxu0 0.0
  %70 = vmatpush1.msra.mxu0 %v29
  %71 = vmatprep.subr.mxu0 0.0
  %72 = vmatpush1.msra.mxu0 %v28
  %73 = vmatprep.subr.mxu0 0.0
  %74 = vmatpush1.msra.mxu0 %v27
  %75 = vmatprep.subr.mxu0 0.0
  %76 = vmatpush2.msra.mxu0 0.0
  %77 = vmatprep.subr.mxu0 0.0
  %78 = vmatpush2.msra.mxu0 0.0
  %79 = vmatprep.subr.mxu0 0.0
  %80 = vmatpush2.msra.mxu0 0.0
  %81 = vmatprep.subr.mxu0 0.0
  %82 = vmatpush2.msra.mxu0 0.0
  %83 = vmatprep.subr.mxu0 0.0
  %84 = vmatpush2.msra.mxu0 0.0
  %85 = vmatprep.subr.mxu0 0.0
  %86 = vmatpush2.msra.mxu0 0.0
  %87 = vmatprep.subr.mxu0 0.0
  %88 = vmatpush2.msra.mxu0 0.0
  %89 = vmatprep.subr.mxu0 0.0
  %90 = vmatpush2.msra.mxu0 0.0
  %91 = vmatprep.subr.mxu0 0.0
  %92 = vmatpush2.msra.mxu0 0.0
  %93 = vmatprep.subr.mxu0 0.0
  %94 = vmatpush2.msra.mxu0 0.0
  %95 = vmatprep.subr.mxu0 0.0
  %96 = vmatpush2.msra.mxu0 0.0
  %97 = vmatprep.subr.mxu0 0.0
  %98 = vmatpush2.msra.mxu0 0.0
  %99 = vmatprep.subr.mxu0 0.0
  %100 = vmatpush2.msra.mxu0 0.0
  %101 = vmatprep.subr.mxu0 0.0
  %102 = vmatpush2.msra.mxu0 0.0
  %103 = vmatprep.subr.mxu0 0.0
  %104 = vmatpush2.msra.mxu0 0.0
  %105 = vmatprep.subr.mxu0 0.0
  %106 = vmatpush2.msra.mxu0 0.0
  %107 = vmatprep.mubr.f32.mxu0 0.0
  %108 = vmatmul.mubr.f32.gmra.mxu0 %v11
  %v109 = vpop.f32.mrf.mxu0
  %v110 = vadd.f32 0.0, %v109
  %v111 = vpop.f32.mrf.mxu0
  %112 = vmatprep.mubr.f32.mxu0 0.0
  %113 = vmatmul.mubr.f32.gmra.mxu0 %v12
  %v114 = vpop.f32.mrf.mxu0
  %v115 = vadd.f32 0.0, %v114
  %v116 = vpop.f32.mrf.mxu0
  %117 = vmatprep.mubr.f32.mxu0 0.0
  %118 = vmatmul.mubr.f32.gmra.mxu0 %v13
  %v119 = vpop.f32.mrf.mxu0
  %v120 = vadd.f32 0.0, %v119
  %v121 = vpop.f32.mrf.mxu0
  %122 = vmatprep.mubr.f32.mxu0 0.0
  %123 = vmatmul.mubr.f32.gmra.mxu0 %v14
  %v124 = vpop.f32.mrf.mxu0
  %v125 = vadd.f32 0.0, %v124
  %v126 = vpop.f32.mrf.mxu0
  %127 = vmatprep.mubr.f32.mxu0 0.0
  %128 = vmatmul.mubr.f32.gmra.mxu0 %v15
  %v129 = vpop.f32.mrf.mxu0
  %v130 = vadd.f32 0.0, %v129
  %v131 = vpop.f32.mrf.mxu0
  %132 = vmatprep.mubr.f32.mxu0 0.0
  %133 = vmatmul.mubr.f32.gmra.mxu0 %v16
  %v134 = vpop.f32.mrf.mxu0
  %v135 = vadd.f32 0.0, %v134
  %v136 = vpop.f32.mrf.mxu0
  %137 = vmatprep.mubr.f32.mxu0 0.0
  %138 = vmatmul.mubr.f32.gmra.mxu0 %v17
  %v139 = vpop.f32.mrf.mxu0
  %v140 = vadd.f32 0.0, %v139
  %v141 = vpop.f32.mrf.mxu0
  %142 = vmatprep.mubr.f32.mxu0 0.0
  %143 = vmatmul.mubr.f32.gmra.mxu0 %v18
  %v144 = vpop.f32.mrf.mxu0
  %v145 = vadd.f32 0.0, %v144
  %v146 = vpop.f32.mrf.mxu0
  %147 = vmatprep.mubr.f32.mxu0 0.0
  %148 = vmatmul.mubr.f32.gmra.mxu0 %v19
  %v149 = vpop.f32.mrf.mxu0
  %v150 = vadd.f32 0.0, %v149
  %v151 = vpop.f32.mrf.mxu0
  %152 = vmatprep.mubr.f32.mxu0 0.0
  %153 = vmatmul.mubr.f32.gmra.mxu0 %v20
  %v154 = vpop.f32.mrf.mxu0
  %v155 = vadd.f32 0.0, %v154
  %v156 = vpop.f32.mrf.mxu0
  %157 = vmatprep.mubr.f32.mxu0 0.0
  %158 = vmatmul.mubr.f32.gmra.mxu0 %v21
  %v159 = vpop.f32.mrf.mxu0
  %v160 = vadd.f32 0.0, %v159
  %v161 = vpop.f32.mrf.mxu0
  %162 = vmatprep.mubr.f32.mxu0 0.0
  %163 = vmatmul.mubr.f32.gmra.mxu0 %v22
  %v164 = vpop.f32.mrf.mxu0
  %v165 = vadd.f32 0.0, %v164
  %v166 = vpop.f32.mrf.mxu0
  %167 = vmatprep.mubr.f32.mxu0 0.0
  %168 = vmatmul.mubr.f32.gmra.mxu0 %v23
  %v169 = vpop.f32.mrf.mxu0
  %v170 = vadd.f32 0.0, %v169
  %v171 = vpop.f32.mrf.mxu0
  %172 = vmatprep.mubr.f32.mxu0 0.0
  %173 = vmatmul.mubr.f32.gmra.mxu0 %v24
  %v174 = vpop.f32.mrf.mxu0
  %v175 = vadd.f32 0.0, %v174
  %v176 = vpop.f32.mrf.mxu0
  %177 = vmatprep.mubr.f32.mxu0 0.0
  %178 = vmatmul.mubr.f32.gmra.mxu0 %v25
  %v179 = vpop.f32.mrf.mxu0
  %v180 = vadd.f32 0.0, %v179
  %v181 = vpop.f32.mrf.mxu0
  %182 = vmatprep.mubr.f32.mxu0 0.0
  %183 = vmatmul.mubr.f32.gmra.mxu0 %v26
  %v184 = vpop.f32.mrf.mxu0
  %v185 = vadd.f32 0.0, %v184
  %v186 = vpop.f32.mrf.mxu0
  %187 = vdwg.mxu0
  %188 = vst [vmem:[%s2] sm:$0xff] %v110
  %189 = vst [vmem:[%s2 + $0x8] sm:$0xff] %v115
  %190 = vst [vmem:[%s2 + $0x10] sm:$0xff] %v120
  %191 = vst [vmem:[%s2 + $0x18] sm:$0xff] %v125
  %192 = vst [vmem:[%s2 + $0x20] sm:$0xff] %v130
  %193 = vst [vmem:[%s2 + $0x28] sm:$0xff] %v135
  %194 = vst [vmem:[%s2 + $0x30] sm:$0xff] %v140
  %195 = vst [vmem:[%s2 + $0x38] sm:$0xff] %v145
  %196 = vst [vmem:[%s2 + $0x40] sm:$0xff] %v150
  %197 = vst [vmem:[%s2 + $0x48] sm:$0xff] %v155
  %198 = vst [vmem:[%s2 + $0x50] sm:$0xff] %v160
  %199 = vst [vmem:[%s2 + $0x58] sm:$0xff] %v165
  %200 = vst [vmem:[%s2 + $0x60] sm:$0xff] %v170
  %201 = vst [vmem:[%s2 + $0x68] sm:$0xff] %v175
  %202 = vst [vmem:[%s2 + $0x70] sm:$0xff] %v180
  %203 = vst [vmem:[%s2 + $0x78] sm:$0xff] %v185
  // Predicated region
  $region10: #{gcn_forward.2} parent=0 // pred_check
    _
  $region11: #{gcn_forward.2} parent=0 // pred_check_branch
    %205 = sbr.rel (0) target = $region13
  $region12: #{gcn_forward.2} parent=0 // pred_region
    _
  $region13: #{gcn_forward.2} parent=0 // pred_fallthru
    _
  // Predicated region
  $region14: #{gcn_forward.2} parent=0 // pred_check
    _
  $region15: #{gcn_forward.2} parent=0 // pred_check_branch
    %207 = sbr.rel (0) target = $region17
  $region16: #{gcn_forward.2} parent=0 // pred_region
    _
  $region17: #{gcn_forward.2} parent=0 // pred_fallthru
    _

// kernel: gcn_forward.3
$region0: #{gcn_forward.3}
  #allocation0 [shape = 'u32[]', space=smem, size = 0x4, offset = 0x4, fixed_abs, tag = 'smem constant byte address 0x4 - core index']
  #allocation1 [shape = 'u32[144,128]{1,0:T(1,128)}', space=vmem, size = 0x12000, scoped, tag = 'internal scratch']
  %s0 = inlined_call_operand.vmem [shape: f32[128,128], index: 0, kind: input, shape index: {}]
  %s1 = inlined_call_operand.vmem [shape: f32[128,128], index: 1, kind: input, shape index: {}]
  %s2 = inlined_call_operand.vmem [shape: f32[1,128], index: 2, kind: input, shape index: {}]
  %s3 = inlined_call_operand.vmem [shape: f32[128,128], index: 3, kind: input, shape index: {}]
  %s4 = inlined_call_operand.vmem [shape: f32[128,128], index: 4, kind: output, shape index: {}]
  %s5 = sld [smem:[#allocation0]]
  $region26: #{gcn_forward.3} parent=0
    _
  %s7 = ssub.s32 1, %s5
  %s8 = scalar_select 0, %s7, %s5
  // Predicated region
  $region2: #{gcn_forward.3} parent=0 // pred_check
    _
  $region3: #{gcn_forward.3} parent=0 // pred_check_branch
    %10 = sbr.rel (0) target = $region5
  $region4: #{gcn_forward.3} parent=0 // pred_region
    _
  $region5: #{gcn_forward.3} parent=0 // pred_fallthru
    _
  // Predicated region
  $region6: #{gcn_forward.3} parent=0 // pred_check
    _
  $region7: #{gcn_forward.3} parent=0 // pred_check_branch
    %12 = sbr.rel (0) target = $region9
  $region8: #{gcn_forward.3} parent=0 // pred_region
    _
  $region9: #{gcn_forward.3} parent=0 // pred_fallthru
    _
  // Predicated region
  $region10: #{gcn_forward.3} parent=0 // pred_check
    _
  $region11: #{gcn_forward.3} parent=0 // pred_check_branch
    %14 = sbr.rel (0) target = $region13
  $region12: #{gcn_forward.3} parent=0 // pred_region
    _
  $region13: #{gcn_forward.3} parent=0 // pred_fallthru
    _
  // Predicated region
  $region14: #{gcn_forward.3} parent=0 // pred_check
    _
  $region15: #{gcn_forward.3} parent=0 // pred_check_branch
    %16 = sbr.rel (0) target = $region17
  $region16: #{gcn_forward.3} parent=0 // pred_region
    _
  $region17: #{gcn_forward.3} parent=0 // pred_fallthru
    _
  %v17 = vld [vmem:[%s0] sm:$0xff]
  %v18 = vld [vmem:[%s0 + $0x8] sm:$0xff]
  %v19 = vld [vmem:[%s0 + $0x10] sm:$0xff]
  %v20 = vld [vmem:[%s0 + $0x18] sm:$0xff]
  %v21 = vld [vmem:[%s0 + $0x20] sm:$0xff]
  %v22 = vld [vmem:[%s0 + $0x28] sm:$0xff]
  %v23 = vld [vmem:[%s0 + $0x30] sm:$0xff]
  %v24 = vld [vmem:[%s0 + $0x38] sm:$0xff]
  %v25 = vld [vmem:[%s0 + $0x40] sm:$0xff]
  %v26 = vld [vmem:[%s0 + $0x48] sm:$0xff]
  %v27 = vld [vmem:[%s0 + $0x50] sm:$0xff]
  %v28 = vld [vmem:[%s0 + $0x58] sm:$0xff]
  %v29 = vld [vmem:[%s0 + $0x60] sm:$0xff]
  %v30 = vld [vmem:[%s0 + $0x68] sm:$0xff]
  %v31 = vld [vmem:[%s0 + $0x70] sm:$0xff]
  %v32 = vld [vmem:[%s0 + $0x78] sm:$0xff]
  %v33 = vld [vmem:[%s1] sm:$0xff]
  %v34 = vld [vmem:[%s1 + $0x8] sm:$0xff]
  %v35 = vld [vmem:[%s1 + $0x10] sm:$0xff]
  %v36 = vld [vmem:[%s1 + $0x18] sm:$0xff]
  %v37 = vld [vmem:[%s1 + $0x20] sm:$0xff]
  %v38 = vld [vmem:[%s1 + $0x28] sm:$0xff]
  %v39 = vld [vmem:[%s1 + $0x30] sm:$0xff]
  %v40 = vld [vmem:[%s1 + $0x38] sm:$0xff]
  %v41 = vld [vmem:[%s1 + $0x40] sm:$0xff]
  %v42 = vld [vmem:[%s1 + $0x48] sm:$0xff]
  %v43 = vld [vmem:[%s1 + $0x50] sm:$0xff]
  %v44 = vld [vmem:[%s1 + $0x58] sm:$0xff]
  %v45 = vld [vmem:[%s1 + $0x60] sm:$0xff]
  %v46 = vld [vmem:[%s1 + $0x68] sm:$0xff]
  %v47 = vld [vmem:[%s1 + $0x70] sm:$0xff]
  %v48 = vld [vmem:[%s1 + $0x78] sm:$0xff]
  %v49 = vld [vmem:[%s2] sm:$0x1]
  %v51 = vlaneseq
  %v52 = vshrl.u32 %v51, 7
  %v53 = vsub.s32 0, %v52
  %v54 = vrot.slane %v49, %v53
  %56 = vmatprep.subr.mxu0 0.0
  %57 = vmatpush1.msra.mxu0 %v48
  %58 = vmatprep.subr.mxu0 0.0
  %59 = vmatpush1.msra.mxu0 %v47
  %60 = vmatprep.subr.mxu0 0.0
  %61 = vmatpush1.msra.mxu0 %v46
  %62 = vmatprep.subr.mxu0 0.0
  %63 = vmatpush1.msra.mxu0 %v45
  %64 = vmatprep.subr.mxu0 0.0
  %65 = vmatpush1.msra.mxu0 %v44
  %66 = vmatprep.subr.mxu0 0.0
  %67 = vmatpush1.msra.mxu0 %v43
  %68 = vmatprep.subr.mxu0 0.0
  %69 = vmatpush1.msra.mxu0 %v42
  %70 = vmatprep.subr.mxu0 0.0
  %71 = vmatpush1.msra.mxu0 %v41
  %72 = vmatprep.subr.mxu0 0.0
  %73 = vmatpush1.msra.mxu0 %v40
  %74 = vmatprep.subr.mxu0 0.0
  %75 = vmatpush1.msra.mxu0 %v39
  %76 = vmatprep.subr.mxu0 0.0
  %77 = vmatpush1.msra.mxu0 %v38
  %78 = vmatprep.subr.mxu0 0.0
  %79 = vmatpush1.msra.mxu0 %v37
  %80 = vmatprep.subr.mxu0 0.0
  %81 = vmatpush1.msra.mxu0 %v36
  %82 = vmatprep.subr.mxu0 0.0
  %83 = vmatpush1.msra.mxu0 %v35
  %84 = vmatprep.subr.mxu0 0.0
  %85 = vmatpush1.msra.mxu0 %v34
  %86 = vmatprep.subr.mxu0 0.0
  %87 = vmatpush1.msra.mxu0 %v33
  %88 = vmatprep.subr.mxu0 0.0
  %89 = vmatpush2.msra.mxu0 0.0
  %90 = vmatprep.subr.mxu0 0.0
  %91 = vmatpush2.msra.mxu0 0.0
  %92 = vmatprep.subr.mxu0 0.0
  %93 = vmatpush2.msra.mxu0 0.0
  %94 = vmatprep.subr.mxu0 0.0
  %95 = vmatpush2.msra.mxu0 0.0
  %96 = vmatprep.subr.mxu0 0.0
  %97 = vmatpush2.msra.mxu0 0.0
  %98 = vmatprep.subr.mxu0 0.0
  %99 = vmatpush2.msra.mxu0 0.0
  %100 = vmatprep.subr.mxu0 0.0
  %101 = vmatpush2.msra.mxu0 0.0
  %102 = vmatprep.subr.mxu0 0.0
  %103 = vmatpush2.msra.mxu0 0.0
  %104 = vmatprep.subr.mxu0 0.0
  %105 = vmatpush2.msra.mxu0 0.0
  %106 = vmatprep.subr.mxu0 0.0
  %107 = vmatpush2.msra.mxu0 0.0
  %108 = vmatprep.subr.mxu0 0.0
  %109 = vmatpush2.msra.mxu0 0.0
  %110 = vmatprep.subr.mxu0 0.0
  %111 = vmatpush2.msra.mxu0 0.0
  %112 = vmatprep.subr.mxu0 0.0
  %113 = vmatpush2.msra.mxu0 0.0
  %114 = vmatprep.subr.mxu0 0.0
  %115 = vmatpush2.msra.mxu0 0.0
  %116 = vmatprep.subr.mxu0 0.0
  %117 = vmatpush2.msra.mxu0 0.0
  %118 = vmatprep.subr.mxu0 0.0
  %119 = vmatpush2.msra.mxu0 0.0
  %120 = vmatprep.mubr.f32.mxu0 0.0
  %121 = vmatmul.mubr.f32.gmra.mxu0 %v17
  %v122 = vpop.f32.mrf.mxu0
  %v123 = vadd.f32 %v54, %v122
  %v124 = vpop.f32.mrf.mxu0
  %125 = vmatprep.mubr.f32.mxu0 0.0
  %126 = vmatmul.mubr.f32.gmra.mxu0 %v18
  %v127 = vpop.f32.mrf.mxu0
  %v128 = vadd.f32 %v54, %v127
  %v129 = vpop.f32.mrf.mxu0
  %130 = vmatprep.mubr.f32.mxu0 0.0
  %131 = vmatmul.mubr.f32.gmra.mxu0 %v19
  %v132 = vpop.f32.mrf.mxu0
  %v133 = vadd.f32 %v54, %v132
  %v134 = vpop.f32.mrf.mxu0
  %135 = vmatprep.mubr.f32.mxu0 0.0
  %136 = vmatmul.mubr.f32.gmra.mxu0 %v20
  %v137 = vpop.f32.mrf.mxu0
  %v138 = vadd.f32 %v54, %v137
  %v139 = vpop.f32.mrf.mxu0
  %140 = vmatprep.mubr.f32.mxu0 0.0
  %141 = vmatmul.mubr.f32.gmra.mxu0 %v21
  %v142 = vpop.f32.mrf.mxu0
  %v143 = vadd.f32 %v54, %v142
  %v144 = vpop.f32.mrf.mxu0
  %145 = vmatprep.mubr.f32.mxu0 0.0
  %146 = vmatmul.mubr.f32.gmra.mxu0 %v22
  %v147 = vpop.f32.mrf.mxu0
  %v148 = vadd.f32 %v54, %v147
  %v149 = vpop.f32.mrf.mxu0
  %150 = vmatprep.mubr.f32.mxu0 0.0
  %151 = vmatmul.mubr.f32.gmra.mxu0 %v23
  %v152 = vpop.f32.mrf.mxu0
  %v153 = vadd.f32 %v54, %v152
  %v154 = vpop.f32.mrf.mxu0
  %155 = vmatprep.mubr.f32.mxu0 0.0
  %156 = vmatmul.mubr.f32.gmra.mxu0 %v24
  %v157 = vpop.f32.mrf.mxu0
  %v158 = vadd.f32 %v54, %v157
  %v159 = vpop.f32.mrf.mxu0
  %160 = vmatprep.mubr.f32.mxu0 0.0
  %161 = vmatmul.mubr.f32.gmra.mxu0 %v25
  %v162 = vpop.f32.mrf.mxu0
  %v163 = vadd.f32 %v54, %v162
  %v164 = vpop.f32.mrf.mxu0
  %165 = vmatprep.mubr.f32.mxu0 0.0
  %166 = vmatmul.mubr.f32.gmra.mxu0 %v26
  %v167 = vpop.f32.mrf.mxu0
  %v168 = vadd.f32 %v54, %v167
  %v169 = vpop.f32.mrf.mxu0
  %170 = vmatprep.mubr.f32.mxu0 0.0
  %171 = vmatmul.mubr.f32.gmra.mxu0 %v27
  %v172 = vpop.f32.mrf.mxu0
  %v173 = vadd.f32 %v54, %v172
  %v174 = vpop.f32.mrf.mxu0
  %175 = vmatprep.mubr.f32.mxu0 0.0
  %176 = vmatmul.mubr.f32.gmra.mxu0 %v28
  %v177 = vpop.f32.mrf.mxu0
  %v178 = vadd.f32 %v54, %v177
  %v179 = vpop.f32.mrf.mxu0
  %180 = vmatprep.mubr.f32.mxu0 0.0
  %181 = vmatmul.mubr.f32.gmra.mxu0 %v29
  %v182 = vpop.f32.mrf.mxu0
  %v183 = vadd.f32 %v54, %v182
  %v184 = vpop.f32.mrf.mxu0
  %185 = vmatprep.mubr.f32.mxu0 0.0
  %186 = vmatmul.mubr.f32.gmra.mxu0 %v30
  %v187 = vpop.f32.mrf.mxu0
  %v188 = vadd.f32 %v54, %v187
  %v189 = vpop.f32.mrf.mxu0
  %190 = vmatprep.mubr.f32.mxu0 0.0
  %191 = vmatmul.mubr.f32.gmra.mxu0 %v31
  %v192 = vpop.f32.mrf.mxu0
  %v193 = vadd.f32 %v54, %v192
  %v194 = vpop.f32.mrf.mxu0
  %195 = vmatprep.mubr.f32.mxu0 0.0
  %196 = vmatmul.mubr.f32.gmra.mxu0 %v32
  %v197 = vpop.f32.mrf.mxu0
  %v198 = vadd.f32 %v54, %v197
  %v199 = vpop.f32.mrf.mxu0
  %200 = vdwg.mxu0
  %v201 = vmax.f32 %v123, 0.0
  %v202 = vmax.f32 %v128, 0.0
  %v203 = vmax.f32 %v133, 0.0
  %v204 = vmax.f32 %v138, 0.0
  %v205 = vmax.f32 %v143, 0.0
  %v206 = vmax.f32 %v148, 0.0
  %v207 = vmax.f32 %v153, 0.0
  %v208 = vmax.f32 %v158, 0.0
  %v209 = vmax.f32 %v163, 0.0
  %v210 = vmax.f32 %v168, 0.0
  %v211 = vmax.f32 %v173, 0.0
  %v212 = vmax.f32 %v178, 0.0
  %v213 = vmax.f32 %v183, 0.0
  %v214 = vmax.f32 %v188, 0.0
  %v215 = vmax.f32 %v193, 0.0
  %v216 = vmax.f32 %v198, 0.0
  %v217 = vld [vmem:[%s3] sm:$0xff]
  %v218 = vld [vmem:[%s3 + $0x8] sm:$0xff]
  %v219 = vld [vmem:[%s3 + $0x10] sm:$0xff]
  %v220 = vld [vmem:[%s3 + $0x18] sm:$0xff]
  %v221 = vld [vmem:[%s3 + $0x20] sm:$0xff]
  %v222 = vld [vmem:[%s3 + $0x28] sm:$0xff]
  %v223 = vld [vmem:[%s3 + $0x30] sm:$0xff]
  %v224 = vld [vmem:[%s3 + $0x38] sm:$0xff]
  %v225 = vld [vmem:[%s3 + $0x40] sm:$0xff]
  %v226 = vld [vmem:[%s3 + $0x48] sm:$0xff]
  %v227 = vld [vmem:[%s3 + $0x50] sm:$0xff]
  %v228 = vld [vmem:[%s3 + $0x58] sm:$0xff]
  %v229 = vld [vmem:[%s3 + $0x60] sm:$0xff]
  %v230 = vld [vmem:[%s3 + $0x68] sm:$0xff]
  %v231 = vld [vmem:[%s3 + $0x70] sm:$0xff]
  %v232 = vld [vmem:[%s3 + $0x78] sm:$0xff]
  %v233 = vadd.f32 %v201, %v217
  %v234 = vadd.f32 %v202, %v218
  %v235 = vadd.f32 %v203, %v219
  %v236 = vadd.f32 %v204, %v220
  %v237 = vadd.f32 %v205, %v221
  %v238 = vadd.f32 %v206, %v222
  %v239 = vadd.f32 %v207, %v223
  %v240 = vadd.f32 %v208, %v224
  %v241 = vadd.f32 %v209, %v225
  %v242 = vadd.f32 %v210, %v226
  %v243 = vadd.f32 %v211, %v227
  %v244 = vadd.f32 %v212, %v228
  %v245 = vadd.f32 %v213, %v229
  %v246 = vadd.f32 %v214, %v230
  %v247 = vadd.f32 %v215, %v231
  %v248 = vadd.f32 %v216, %v232
  %249 = vst [vmem:[%s4] sm:$0xff] %v233
  %250 = vst [vmem:[%s4 + $0x8] sm:$0xff] %v234
  %251 = vst [vmem:[%s4 + $0x10] sm:$0xff] %v235
  %252 = vst [vmem:[%s4 + $0x18] sm:$0xff] %v236
  %253 = vst [vmem:[%s4 + $0x20] sm:$0xff] %v237
  %254 = vst [vmem:[%s4 + $0x28] sm:$0xff] %v238
  %255 = vst [vmem:[%s4 + $0x30] sm:$0xff] %v239
  %256 = vst [vmem:[%s4 + $0x38] sm:$0xff] %v240
  %257 = vst [vmem:[%s4 + $0x40] sm:$0xff] %v241
  %258 = vst [vmem:[%s4 + $0x48] sm:$0xff] %v242
  %259 = vst [vmem:[%s4 + $0x50] sm:$0xff] %v243
  %260 = vst [vmem:[%s4 + $0x58] sm:$0xff] %v244
  %261 = vst [vmem:[%s4 + $0x60] sm:$0xff] %v245
  %262 = vst [vmem:[%s4 + $0x68] sm:$0xff] %v246
  %263 = vst [vmem:[%s4 + $0x70] sm:$0xff] %v247
  %264 = vst [vmem:[%s4 + $0x78] sm:$0xff] %v248
  // Predicated region
  $region18: #{gcn_forward.3} parent=0 // pred_check
    _
  $region19: #{gcn_forward.3} parent=0 // pred_check_branch
    %266 = sbr.rel (0) target = $region21
  $region20: #{gcn_forward.3} parent=0 // pred_region
    _
  $region21: #{gcn_forward.3} parent=0 // pred_fallthru
    _
  // Predicated region
  $region22: #{gcn_forward.3} parent=0 // pred_check
    _
  $region23: #{gcn_forward.3} parent=0 // pred_check_branch
    %268 = sbr.rel (0) target = $region25
  $region24: #{gcn_forward.3} parent=0 // pred_region
    _
  $region25: #{gcn_forward.3} parent=0 // pred_fallthru
    _

</llo_original>
